<compile_context>
chip_gen: v7x
topology: tpu7x:2x2x1
jax: 0.10.0
libtpu: 0.0.40
codegen_flags: <defaults>
</compile_context>

<pallas_src>
import jax
import jax.numpy as jnp
from jax.experimental import pallas as pl
from jax.experimental.pallas import tpu as pltpu

LRELU_SLOPE = 0.01  # PyTorch nn.LeakyReLU default negative_slope


# ---------------------------------------------------------------------------
# Fused Pallas kernel: (x @ W + b) -> LeakyReLU
# ---------------------------------------------------------------------------
def _linear_lrelu_kernel(x_ref, w_ref, b_ref, o_ref):
    y = jnp.dot(x_ref[...], w_ref[...], preferred_element_type=jnp.float32)
    y = y + b_ref[...]
    o_ref[...] = jnp.where(y >= 0, y, LRELU_SLOPE * y)


def _round_up(v, m):
    return ((v + m - 1) // m) * m


def embed_forward(x, weight, bias):
    """Embed.forward.

    x:      (B, input_dim)            float32
    weight: (emb_dim, input_dim)      PyTorch nn.Linear weight layout
    bias:   (emb_dim,)
    returns (B, emb_dim, 1, 1)
    """
    m, k = x.shape
    emb_dim = weight.shape[0]

    # Lane-dense / sublane-aligned padding.
    n_p = _round_up(emb_dim, 128)                 # output lane dim (unmasked vst)
    k_p = _round_up(k, 128)                       # contraction lane dim (unmasked vld)
    tm = 512 if m > 512 else _round_up(m, 8)      # single grid step for small batches
    m_p = _round_up(m, tm)

    x_p = jnp.pad(x.astype(jnp.float32), ((0, m_p - m), (0, k_p - k)))
    w_p = jnp.pad(weight.astype(jnp.float32).T, ((0, k_p - k), (0, n_p - emb_dim)))
    b_p = jnp.pad(bias.astype(jnp.float32), (0, n_p - emb_dim)).reshape(1, n_p)

    out = pl.pallas_call(
        _linear_lrelu_kernel,
        out_shape=jax.ShapeDtypeStruct((m_p, n_p), jnp.float32),
        grid=(m_p // tm,),
        in_specs=[
            pl.BlockSpec((tm, k_p), lambda i: (i, 0)),    # activations, tiled over rows
            pl.BlockSpec((k_p, n_p), lambda i: (0, 0)),   # weight, resident
            pl.BlockSpec((1, n_p), lambda i: (0, 0)),     # bias, resident
        ],
        out_specs=pl.BlockSpec((tm, n_p), lambda i: (i, 0)),
        compiler_params=pltpu.CompilerParams(
            dimension_semantics=("parallel",)),
    )(x_p, w_p, b_p)

    y = out[:m, :emb_dim]
    # The trailing .view(-1, emb_dim, 1, 1) is a pure reshape (done in the wrapper).
    return y.reshape(-1, emb_dim, 1, 1)


# ---------------------------------------------------------------------------
if __name__ == "__main__":
    key = jax.random.PRNGKey(0)
    k_x, k_w, k_b = jax.random.split(key, 3)

    BATCH, INPUT_DIM, EMB_DIM = 8, 32, 128
    x = jax.random.normal(k_x, (BATCH, INPUT_DIM), jnp.float32)

    # Parameters in PyTorch nn.Linear layout / init scale (~U(-1/sqrt(fan_in), ...)).
    bound = 1.0 / (INPUT_DIM ** 0.5)
    weight = jax.random.uniform(k_w, (EMB_DIM, INPUT_DIM), jnp.float32, -bound, bound)
    bias = jax.random.uniform(k_b, (EMB_DIM,), jnp.float32, -bound, bound)

    fwd = jax.jit(embed_forward)
    out = jax.block_until_ready(fwd(x, weight, bias))
    assert out.shape == (BATCH, EMB_DIM, 1, 1), out.shape

    # Pure-JAX reference of the PyTorch module.
    y_ref = x @ weight.T + bias
    y_ref = jnp.where(y_ref >= 0, y_ref, LRELU_SLOPE * y_ref)
    ref = y_ref.reshape(-1, EMB_DIM, 1, 1)
    assert jnp.allclose(out, ref, rtol=5e-3, atol=5e-3), \
        float(jnp.max(jnp.abs(out - ref)))

    print("KERNEL_OK")
</pallas_src>

<mosaic_0001>
module attributes {stable_mosaic.version = 11 : i64} {
  func.func @_linear_lrelu_kernel(%arg0: i32, %arg1: memref<8x128xf32, #tpu.memory_space<vmem>>, %arg2: memref<128x128xf32, #tpu.memory_space<vmem>>, %arg3: memref<1x128xf32, #tpu.memory_space<vmem>>, %arg4: memref<8x128xf32, #tpu.memory_space<vmem>>) attributes {dimension_semantics = [#tpu.dimension_semantics<parallel>], iteration_bounds = array<i64: 1>, scalar_prefetch = 0 : i64, scratch_operands = 0 : i64, tpu.core_type = #tpu.core_type<tc>, window_params = [{transform_indices = @transform_0, window_bounds = array<i64: 8, 128>}, {pipeline_mode = #tpu.pipeline_mode<synchronous>, transform_indices = @transform_1, window_bounds = array<i64: 128, 128>}, {pipeline_mode = #tpu.pipeline_mode<synchronous>, transform_indices = @transform_2, window_bounds = array<i64: 1, 128>}, {transform_indices = @transform_3, window_bounds = array<i64: 8, 128>}]} {
    %c0 = arith.constant 0 : index
    %c0_0 = arith.constant 0 : index
    %0 = vector.load %arg1[%c0, %c0_0] : memref<8x128xf32, #tpu.memory_space<vmem>>, vector<8x128xf32>
    %c0_1 = arith.constant 0 : index
    %c0_2 = arith.constant 0 : index
    %1 = vector.load %arg2[%c0_1, %c0_2] : memref<128x128xf32, #tpu.memory_space<vmem>>, vector<128x128xf32>
    %cst = arith.constant dense<0.000000e+00> : vector<8x128xf32>
    %2 = tpu.matmul %0, %1, %cst {dimension_numbers = #tpu.dot_dimension_numbers<[1], [0], [0], [1], [0, 0, 1, 1], [], []>} : vector<8x128xf32>, vector<128x128xf32>, vector<8x128xf32> -> vector<8x128xf32>
    %c0_3 = arith.constant 0 : index
    %c0_4 = arith.constant 0 : index
    %3 = vector.load %arg3[%c0_3, %c0_4] : memref<1x128xf32, #tpu.memory_space<vmem>>, vector<1x128xf32>
    %4 = vector.broadcast %3 : vector<1x128xf32> to vector<8x128xf32>
    %5 = arith.addf %2, %4 : vector<8x128xf32>
    %cst_5 = arith.constant 0.000000e+00 : f32
    %6 = vector.broadcast %cst_5 : f32 to vector<8x128xf32>
    %7 = arith.cmpf oge, %5, %6 : vector<8x128xf32>
    %cst_6 = arith.constant 0.00999999977 : f32
    %8 = vector.broadcast %cst_6 : f32 to vector<8x128xf32>
    %9 = arith.mulf %8, %5 : vector<8x128xf32>
    %10 = arith.select %7, %5, %9 : vector<8x128xi1>, vector<8x128xf32>
    %c0_7 = arith.constant 0 : index
    %c0_8 = arith.constant 0 : index
    %11 = vector.load %arg4[%c0_7, %c0_8] : memref<8x128xf32, #tpu.memory_space<vmem>>, vector<8x128xf32>
    tpu.vector_store %arg4[%c0_7, %c0_8], %10 {strides = array<i32>} : memref<8x128xf32, #tpu.memory_space<vmem>>, vector<8x128xf32>,
    return
  }
  func.func @transform_0(%arg0: i32) -> (i32, i32) {
    %c0_i32 = arith.constant 0 : i32
    %c0_i32_0 = arith.constant 0 : i32
    return %arg0, %c0_i32 : i32, i32
  }
  func.func @transform_1(%arg0: i32) -> (i32, i32) {
    %c0_i32 = arith.constant 0 : i32
    %c0_i32_0 = arith.constant 0 : i32
    %c0_i32_1 = arith.constant 0 : i32
    return %c0_i32, %c0_i32_0 : i32, i32
  }
  func.func @transform_2(%arg0: i32) -> (i32, i32) {
    %c0_i32 = arith.constant 0 : i32
    %c0_i32_0 = arith.constant 0 : i32
    %c0_i32_1 = arith.constant 0 : i32
    return %c0_i32, %c0_i32_0 : i32, i32
  }
  func.func @transform_3(%arg0: i32) -> (i32, i32) {
    %c0_i32 = arith.constant 0 : i32
    %c0_i32_0 = arith.constant 0 : i32
    return %arg0, %c0_i32 : i32, i32
  }
}

</mosaic_0001>

<llo_original>
// kernel: embed_forward.1
$region0: #{embed_forward.1}
  #allocation0 [shape = 'u32[]', space=smem, size = 0x4, offset = 0x4, fixed_abs, tag = 'smem constant byte address 0x4 - core index']
  #allocation1 [shape = 'u32[144,128]{1,0:T(1,128)}', space=vmem, size = 0x12000, scoped, tag = 'internal scratch']
  %s0 = inlined_call_operand.vmem [shape: f32[8,128], index: 0, kind: input, shape index: {}]
  %s1 = inlined_call_operand.vmem [shape: f32[128,128], index: 1, kind: input, shape index: {}]
  %s2 = inlined_call_operand.vmem [shape: f32[1,128], index: 2, kind: input, shape index: {}]
  %s3 = inlined_call_operand.hbm [shape: f32[8,128], index: 3, kind: output, shape index: {}]
  %s4 = sld [smem:[#allocation0]]
  $region22: #{embed_forward.1} parent=0
    _
  %s6 = ssub.s32 1, %s4
  %s7 = scalar_select 0, %s6, %s4
  $region1: #{embed_forward.1} parent=0
    #allocation2 [shape = 'u8[4096]{0}', space=vmem, size = 0x1000, scoped, tag = 'output window, operand 0, single buffered']
    #allocation3 [shape = 's32[1]{0}', space=sflag, size = 0x4, scoped, tag = 'scoped memory for embed_forward.1']
    %8 = vsyncpa [#allocation3], 0
    // Predicated region
    $region2: #{embed_forward.1} parent=1 // pred_check
      _
    $region3: #{embed_forward.1} parent=1 // pred_check_branch
      %10 = sbr.rel (0) target = $region5
    $region4: #{embed_forward.1} parent=1 // pred_region
      _
    $region5: #{embed_forward.1} parent=1 // pred_fallthru
      _
    // Predicated region
    $region6: #{embed_forward.1} parent=1 // pred_check
      _
    $region7: #{embed_forward.1} parent=1 // pred_check_branch
      %12 = sbr.rel (0) target = $region9
    $region8: #{embed_forward.1} parent=1 // pred_region
      _
    $region9: #{embed_forward.1} parent=1 // pred_fallthru
      _
    // Predicated region
    $region10: #{embed_forward.1} parent=1 // pred_check
      _
    $region11: #{embed_forward.1} parent=1 // pred_check_branch
      %14 = sbr.rel (0) target = $region13
    $region12: #{embed_forward.1} parent=1 // pred_region
      _
    $region13: #{embed_forward.1} parent=1 // pred_fallthru
      _
    %v15 = vld [vmem:[%s0] sm:$0xff]
    %v16 = vld [vmem:[%s1] sm:$0xff]
    %v17 = vld [vmem:[%s1 + $0x8] sm:$0xff]
    %v18 = vld [vmem:[%s1 + $0x10] sm:$0xff]
    %v19 = vld [vmem:[%s1 + $0x18] sm:$0xff]
    %v20 = vld [vmem:[%s1 + $0x20] sm:$0xff]
    %v21 = vld [vmem:[%s1 + $0x28] sm:$0xff]
    %v22 = vld [vmem:[%s1 + $0x30] sm:$0xff]
    %v23 = vld [vmem:[%s1 + $0x38] sm:$0xff]
    %v24 = vld [vmem:[%s1 + $0x40] sm:$0xff]
    %v25 = vld [vmem:[%s1 + $0x48] sm:$0xff]
    %v26 = vld [vmem:[%s1 + $0x50] sm:$0xff]
    %v27 = vld [vmem:[%s1 + $0x58] sm:$0xff]
    %v28 = vld [vmem:[%s1 + $0x60] sm:$0xff]
    %v29 = vld [vmem:[%s1 + $0x68] sm:$0xff]
    %v30 = vld [vmem:[%s1 + $0x70] sm:$0xff]
    %v31 = vld [vmem:[%s1 + $0x78] sm:$0xff]
    %v32 = vld [vmem:[%s2] sm:$0x1]
    %v34 = vlaneseq
    %v35 = vshrl.u32 %v34, 7
    %v36 = vsub.s32 0, %v35
    %v37 = vrot.slane %v32, %v36
    %39 = vmatprep.subr.mxu0 0.0
    %40 = vmatpush1.msra.mxu0 %v16
    %41 = vmatprep.subr.mxu0 0.0
    %42 = vmatpush1.msra.mxu0 %v17
    %43 = vmatprep.subr.mxu0 0.0
    %44 = vmatpush1.msra.mxu0 %v18
    %45 = vmatprep.subr.mxu0 0.0
    %46 = vmatpush1.msra.mxu0 %v19
    %47 = vmatprep.subr.mxu0 0.0
    %48 = vmatpush1.msra.mxu0 %v20
    %49 = vmatprep.subr.mxu0 0.0
    %50 = vmatpush1.msra.mxu0 %v21
    %51 = vmatprep.subr.mxu0 0.0
    %52 = vmatpush1.msra.mxu0 %v22
    %53 = vmatprep.subr.mxu0 0.0
    %54 = vmatpush1.msra.mxu0 %v23
    %55 = vmatprep.subr.mxu0 0.0
    %56 = vmatpush1.msra.mxu0 %v24
    %57 = vmatprep.subr.mxu0 0.0
    %58 = vmatpush1.msra.mxu0 %v25
    %59 = vmatprep.subr.mxu0 0.0
    %60 = vmatpush1.msra.mxu0 %v26
    %61 = vmatprep.subr.mxu0 0.0
    %62 = vmatpush1.msra.mxu0 %v27
    %63 = vmatprep.subr.mxu0 0.0
    %64 = vmatpush1.msra.mxu0 %v28
    %65 = vmatprep.subr.mxu0 0.0
    %66 = vmatpush1.msra.mxu0 %v29
    %67 = vmatprep.subr.mxu0 0.0
    %68 = vmatpush1.msra.mxu0 %v30
    %69 = vmatprep.subr.mxu0 0.0
    %70 = vmatpush1.msra.mxu0 %v31
    %71 = vmatprep.subr.mxu0 0.0
    %72 = vmatpush1.msra.mxu0 0.0
    %73 = vmatprep.subr.mxu0 0.0
    %74 = vmatpush1.msra.mxu0 0.0
    %75 = vmatprep.subr.mxu0 0.0
    %76 = vmatpush1.msra.mxu0 0.0
    %77 = vmatprep.subr.mxu0 0.0
    %78 = vmatpush1.msra.mxu0 0.0
    %79 = vmatprep.subr.mxu0 0.0
    %80 = vmatpush1.msra.mxu0 0.0
    %81 = vmatprep.subr.mxu0 0.0
    %82 = vmatpush1.msra.mxu0 0.0
    %83 = vmatprep.subr.mxu0 0.0
    %84 = vmatpush1.msra.mxu0 0.0
    %85 = vmatprep.subr.mxu0 0.0
    %86 = vmatpush1.msra.mxu0 0.0
    %87 = vmatprep.subr.mxu0 0.0
    %88 = vmatpush1.msra.mxu0 0.0
    %89 = vmatprep.subr.mxu0 0.0
    %90 = vmatpush1.msra.mxu0 0.0
    %91 = vmatprep.subr.mxu0 0.0
    %92 = vmatpush1.msra.mxu0 0.0
    %93 = vmatprep.subr.mxu0 0.0
    %94 = vmatpush1.msra.mxu0 0.0
    %95 = vmatprep.subr.mxu0 0.0
    %96 = vmatpush1.msra.mxu0 0.0
    %97 = vmatprep.subr.mxu0 0.0
    %98 = vmatpush1.msra.mxu0 0.0
    %99 = vmatprep.subr.mxu0 0.0
    %100 = vmatpush1.msra.mxu0 0.0
    %101 = vmatprep.subr.mxu0 0.0
    %102 = vmatpush1.msra.mxu0 0.0
    %103 = vmatprep.mubr.f32.mxu0 0.0
    %104 = vmatmul.mubr.f32.gmra.mrb[0].mxu0 %v15
    %v105 = vpop.f32.mrb[0].mxu0
    %v106 = vadd.f32 %v37, %v105
    %v107 = vpop.f32.mrb[0].mxu0
    %108 = vdwg.mxu0
    %vm109 = vcmp.ge.f32.partialorder %v106, 0.0
    %v110 = vmul.f32 %v106, 0.01
    %v111 = vsel %vm109, %v106, %v110
    %112 = vst [vmem:[#allocation2] sm:$0xff] %v111
    // Predicated region
    $region14: #{embed_forward.1} parent=1 // pred_check
      _
    $region15: #{embed_forward.1} parent=1 // pred_check_branch
      %114 = sbr.rel (0) target = $region17
    $region16: #{embed_forward.1} parent=1 // pred_region
      %s116 = ssub.s32 128, 128
      %117 = vsyncadd [#allocation3], %s116
      %s119 = sshll.u32 [#allocation2], 4
      %s120 = int_to_ptr.vmem [resolvable:$true] %s119
      %122 = dma.vmem_to_hbm [thread:$0]  %s120, 128, %s3, [#allocation3]
    $region17: #{embed_forward.1} parent=1 // pred_fallthru
      _
    // Predicated region
    $region18: #{embed_forward.1} parent=1 // pred_check
      _
    $region19: #{embed_forward.1} parent=1 // pred_check_branch
      %124 = sbr.rel (0) target = $region21
    $region20: #{embed_forward.1} parent=1 // pred_region
      %125 = dma.done [#allocation3], 128
    $region21: #{embed_forward.1} parent=1 // pred_fallthru
      _
    %126 = vsyncpa [#allocation3], 1

</llo_original>
